<compile_context>
chip_gen: v7x
topology: tpu7x:2x2x1
jax: 0.10.0
libtpu: 0.0.40
codegen_flags: <defaults>
</compile_context>

<pallas_src>
import jax
import jax.numpy as jnp
from jax.experimental import pallas as pl
from jax.experimental.pallas import tpu as pltpu


HID_SIZE = 100         # logical hidden size (matches the PyTorch module)
HID_PAD = 128          # lane-aligned padded hidden size (one spare lane holds b2)
MAX_BATCH_TILE = 2048  # double-buffered bf16 obs tile at 2048 rows ~= 0.2 MiB: VMEM is not the constraint
MIN_SPLIT_BATCH = 512  # below this, use a single block (grid of 1): minimal per-step overhead


def _round_up(x, m):
    return ((x + m - 1) // m) * m


def _pick_batch_tile(batch):
    """Batch tile: large (few grid steps), >=2 steps for big batches (v7x 2 TCs)."""
    if batch > MAX_BATCH_TILE:
        return MAX_BATCH_TILE
    if batch >= MIN_SPLIT_BATCH:
        # >= 2 grid steps so both v7x TensorCores get work; multi-block tiles
        # must be a multiple of 8 sublanes.
        return _round_up(pl.cdiv(batch, 2), 8)
    # Single block covering the whole (small) batch: block dim == full array
    # dim, so no 8-row alignment requirement and no padding at all.
    return batch


def _critic_kernel(obs_ref, act_ref, w1o_ref, w1a_ref, b1_ref, w2_ref, q_ref):
    # Layer 1: concat fused as two small-K bf16 MXU matmuls, fp32 accumulation.
    h = jnp.dot(obs_ref[...], w1o_ref[...], preferred_element_type=jnp.float32)
    h = h + jnp.dot(act_ref[...], w1a_ref[...], preferred_element_type=jnp.float32)
    h = jnp.maximum(h + b1_ref[...], 0.0)
    # Layer 2: VPU multiply + XLU lane reduce (no N=1 MXU matmul).  b2 is folded
    # into lane HID_SIZE of b1/w2 (exact), so no extra scalar add is needed.
    q = jnp.sum(h * w2_ref[...], axis=-1, keepdims=True)
    q_ref[...] = q.astype(q_ref.dtype)


def prepare_critic_params(w1, b1, w2, b2, obs_dim):
    """One-time parameter prep (padding / split / dtype), outside the hot path.

    Inputs:  w1 [obs_dim+act_dim, HID_SIZE], b1 [HID_SIZE], w2 [HID_SIZE, 1], b2 [1]
    Returns: w1o [obs_dim, HID_PAD] bf16, w1a [act_dim, HID_PAD] bf16,
             b1_p [1, HID_PAD] f32,  w2_row [1, HID_PAD] f32.
    Zero-padding of the hidden dim is exact; b2 is folded exactly into lane
    HID_SIZE (its W1 column is zero, b1 lane = 1 -> relu(1) = 1, w2 lane = b2).
    """
    _, hid = w1.shape
    assert hid < HID_PAD, "need one spare padded lane to fold b2"
    pad = HID_PAD - hid

    w1_p = jnp.pad(w1.astype(jnp.float32), ((0, 0), (0, pad)))
    w1o = w1_p[:obs_dim].astype(jnp.bfloat16)   # rows matching obs features
    w1a = w1_p[obs_dim:].astype(jnp.bfloat16)   # rows matching act features

    b1_p = jnp.pad(b1.astype(jnp.float32), (0, pad)).at[hid].set(1.0)
    b1_p = b1_p.reshape(1, HID_PAD)

    b2_scalar = jnp.asarray(b2, jnp.float32).reshape(())
    w2_row = jnp.pad(w2.astype(jnp.float32).reshape(hid), (0, pad))
    w2_row = w2_row.at[hid].set(b2_scalar).reshape(1, HID_PAD)
    return w1o, w1a, b1_p, w2_row


@jax.jit
def critic_forward(obs, act, w1o, w1a, b1_p, w2_row):
    """obs: [B, obs_dim], act: [B, act_dim]; params from prepare_critic_params.

    Returns Q: [B, 1] (float32).
    """
    batch, obs_dim = obs.shape
    act_dim = act.shape[1]

    # bf16 MXU operands; accumulation stays fp32 inside the kernel.  In a real
    # DDPG step this cast fuses with whatever produced obs/act.
    obs16 = obs.astype(jnp.bfloat16)
    act16 = act.astype(jnp.bfloat16)

    tb = _pick_batch_tile(batch)
    grid = (pl.cdiv(batch, tb),)

    return pl.pallas_call(
        _critic_kernel,
        out_shape=jax.ShapeDtypeStruct((batch, 1), jnp.float32),
        grid=grid,
        in_specs=[
            pl.BlockSpec((tb, obs_dim), lambda i: (i, 0)),        # obs: batch-tiled
            pl.BlockSpec((tb, act_dim), lambda i: (i, 0)),        # act: batch-tiled
            pl.BlockSpec((obs_dim, HID_PAD), lambda i: (0, 0)),   # W1_obs: VMEM-resident
            pl.BlockSpec((act_dim, HID_PAD), lambda i: (0, 0)),   # W1_act: VMEM-resident
            pl.BlockSpec((1, HID_PAD), lambda i: (0, 0)),         # b1 (lane 100 = 1.0)
            pl.BlockSpec((1, HID_PAD), lambda i: (0, 0)),         # w2 row (lane 100 = b2)
        ],
        out_specs=pl.BlockSpec((tb, 1), lambda i: (i, 0)),
        compiler_params=pltpu.CompilerParams(
            dimension_semantics=("parallel",),  # batch tiles shardable across TCs (v7x)
        ),
    )(obs16, act16, w1o, w1a, b1_p, w2_row)


def init_critic_params(key, obs_dim, act_dim, hid=HID_SIZE):
    """Deterministic init mimicking torch.nn.Linear default U[-1/sqrt(fan_in), 1/sqrt(fan_in)]."""
    k1, k2, k3, k4 = jax.random.split(key, 4)
    in1 = obs_dim + act_dim
    bound1 = 1.0 / jnp.sqrt(in1)
    bound2 = 1.0 / jnp.sqrt(hid)
    w1 = jax.random.uniform(k1, (in1, hid), jnp.float32, -bound1, bound1)
    b1 = jax.random.uniform(k2, (hid,), jnp.float32, -bound1, bound1)
    w2 = jax.random.uniform(k3, (hid, 1), jnp.float32, -bound2, bound2)
    b2 = jax.random.uniform(k4, (1,), jnp.float32, -bound2, bound2)
    return w1, b1, w2, b2


def critic_reference(obs, act, w1, b1, w2, b2):
    x = jnp.concatenate([obs, act], axis=1)
    h = jnp.maximum(x @ w1 + b1, 0.0)
    return h @ w2 + b2


if __name__ == "__main__":
    key = jax.random.PRNGKey(0)
    k_obs, k_act, k_par = jax.random.split(key, 3)

    batch, obs_dim, act_dim = 8, 16, 6
    obs = jax.random.normal(k_obs, (batch, obs_dim), jnp.float32)
    act = jax.random.normal(k_act, (batch, act_dim), jnp.float32)

    w1, b1, w2, b2 = init_critic_params(k_par, obs_dim, act_dim)
    # One-time parameter prep (pad / split / bf16 cast) outside the hot path.
    w1o, w1a, b1_p, w2_row = prepare_critic_params(w1, b1, w2, b2, obs_dim)

    q = jax.block_until_ready(critic_forward(obs, act, w1o, w1a, b1_p, w2_row))
    q_ref = critic_reference(obs, act, w1, b1, w2, b2)
    assert q.shape == (batch, 1), q.shape
    # bf16 MXU operands (fp32 accumulation): ~1e-3 relative vs. the fp32 reference.
    assert jnp.allclose(q, q_ref, atol=3e-2, rtol=3e-2), (q, q_ref)

    # Larger, non-tile-multiple batch: exercises the multi-step "parallel" grid
    # and the partial last block (no wrapper-side padding / concat copies).
    big = 1000
    kb1, kb2 = jax.random.split(jax.random.PRNGKey(1))
    obs_b = jax.random.normal(kb1, (big, obs_dim), jnp.float32)
    act_b = jax.random.normal(kb2, (big, act_dim), jnp.float32)
    q_b = jax.block_until_ready(critic_forward(obs_b, act_b, w1o, w1a, b1_p, w2_row))
    q_b_ref = critic_reference(obs_b, act_b, w1, b1, w2, b2)
    assert q_b.shape == (big, 1), q_b.shape
    assert jnp.allclose(q_b, q_b_ref, atol=3e-2, rtol=3e-2)

    print("KERNEL_OK")
</pallas_src>

<mosaic_0001>
module attributes {stable_mosaic.version = 11 : i64} {
  func.func @_critic_kernel(%arg0: i32, %arg1: memref<8x16xbf16, #tpu.memory_space<vmem>>, %arg2: memref<8x6xbf16, #tpu.memory_space<vmem>>, %arg3: memref<16x128xbf16, #tpu.memory_space<vmem>>, %arg4: memref<6x128xbf16, #tpu.memory_space<vmem>>, %arg5: memref<1x128xf32, #tpu.memory_space<vmem>>, %arg6: memref<1x128xf32, #tpu.memory_space<vmem>>, %arg7: memref<8x1xf32, #tpu.memory_space<vmem>>) attributes {dimension_semantics = [#tpu.dimension_semantics<parallel>], iteration_bounds = array<i64: 1>, scalar_prefetch = 0 : i64, scratch_operands = 0 : i64, tpu.core_type = #tpu.core_type<tc>, window_params = [{transform_indices = @transform_0, window_bounds = array<i64: 8, 16>}, {transform_indices = @transform_1, window_bounds = array<i64: 8, 6>}, {pipeline_mode = #tpu.pipeline_mode<synchronous>, transform_indices = @transform_2, window_bounds = array<i64: 16, 128>}, {pipeline_mode = #tpu.pipeline_mode<synchronous>, transform_indices = @transform_3, window_bounds = array<i64: 6, 128>}, {pipeline_mode = #tpu.pipeline_mode<synchronous>, transform_indices = @transform_4, window_bounds = array<i64: 1, 128>}, {pipeline_mode = #tpu.pipeline_mode<synchronous>, transform_indices = @transform_5, window_bounds = array<i64: 1, 128>}, {transform_indices = @transform_6, window_bounds = array<i64: 8, 1>}]} {
    %c0 = arith.constant 0 : index
    %c0_0 = arith.constant 0 : index
    %0 = vector.load %arg1[%c0, %c0_0] : memref<8x16xbf16, #tpu.memory_space<vmem>>, vector<8x16xbf16>
    %c0_1 = arith.constant 0 : index
    %c0_2 = arith.constant 0 : index
    %1 = vector.load %arg3[%c0_1, %c0_2] : memref<16x128xbf16, #tpu.memory_space<vmem>>, vector<16x128xbf16>
    %cst = arith.constant dense<0.000000e+00> : vector<8x128xf32>
    %2 = tpu.matmul %0, %1, %cst {dimension_numbers = #tpu.dot_dimension_numbers<[1], [0], [0], [1], [0, 0, 1, 1], [], []>} : vector<8x16xbf16>, vector<16x128xbf16>, vector<8x128xf32> -> vector<8x128xf32>
    %c0_3 = arith.constant 0 : index
    %c0_4 = arith.constant 0 : index
    %3 = vector.load %arg2[%c0_3, %c0_4] : memref<8x6xbf16, #tpu.memory_space<vmem>>, vector<8x6xbf16>
    %c0_5 = arith.constant 0 : index
    %c0_6 = arith.constant 0 : index
    %4 = vector.load %arg4[%c0_5, %c0_6] : memref<6x128xbf16, #tpu.memory_space<vmem>>, vector<6x128xbf16>
    %cst_7 = arith.constant dense<0.000000e+00> : vector<8x128xf32>
    %5 = tpu.matmul %3, %4, %cst_7 {dimension_numbers = #tpu.dot_dimension_numbers<[1], [0], [0], [1], [0, 0, 1, 1], [], []>} : vector<8x6xbf16>, vector<6x128xbf16>, vector<8x128xf32> -> vector<8x128xf32>
    %6 = arith.addf %2, %5 : vector<8x128xf32>
    %c0_8 = arith.constant 0 : index
    %c0_9 = arith.constant 0 : index
    %7 = vector.load %arg5[%c0_8, %c0_9] : memref<1x128xf32, #tpu.memory_space<vmem>>, vector<1x128xf32>
    %8 = vector.broadcast %7 : vector<1x128xf32> to vector<8x128xf32>
    %9 = arith.addf %6, %8 : vector<8x128xf32>
    %cst_10 = arith.constant 0.000000e+00 : f32
    %10 = vector.broadcast %cst_10 : f32 to vector<8x128xf32>
    %11 = arith.maximumf %9, %10 : vector<8x128xf32>
    %c0_11 = arith.constant 0 : index
    %c0_12 = arith.constant 0 : index
    %12 = vector.load %arg6[%c0_11, %c0_12] : memref<1x128xf32, #tpu.memory_space<vmem>>, vector<1x128xf32>
    %13 = vector.broadcast %12 : vector<1x128xf32> to vector<8x128xf32>
    %14 = arith.mulf %11, %13 : vector<8x128xf32>
    %cst_13 = arith.constant dense<0.000000e+00> : vector<8xf32>
    %15 = vector.multi_reduction <add>, %14, %cst_13 [1] : vector<8x128xf32> to vector<8xf32>
    %16 = vector.shape_cast %15 : vector<8xf32> to vector<8x1xf32>
    %c0_14 = arith.constant 0 : index
    %c0_15 = arith.constant 0 : index
    %17 = vector.load %arg7[%c0_14, %c0_15] : memref<8x1xf32, #tpu.memory_space<vmem>>, vector<8x1xf32>
    tpu.vector_store %arg7[%c0_14, %c0_15], %16 {strides = array<i32>} : memref<8x1xf32, #tpu.memory_space<vmem>>, vector<8x1xf32>,
    return
  }
  func.func @transform_0(%arg0: i32) -> (i32, i32) {
    %c0_i32 = arith.constant 0 : i32
    %c0_i32_0 = arith.constant 0 : i32
    return %arg0, %c0_i32 : i32, i32
  }
  func.func @transform_1(%arg0: i32) -> (i32, i32) {
    %c0_i32 = arith.constant 0 : i32
    %c0_i32_0 = arith.constant 0 : i32
    return %arg0, %c0_i32 : i32, i32
  }
  func.func @transform_2(%arg0: i32) -> (i32, i32) {
    %c0_i32 = arith.constant 0 : i32
    %c0_i32_0 = arith.constant 0 : i32
    %c0_i32_1 = arith.constant 0 : i32
    return %c0_i32, %c0_i32_0 : i32, i32
  }
  func.func @transform_3(%arg0: i32) -> (i32, i32) {
    %c0_i32 = arith.constant 0 : i32
    %c0_i32_0 = arith.constant 0 : i32
    %c0_i32_1 = arith.constant 0 : i32
    return %c0_i32, %c0_i32_0 : i32, i32
  }
  func.func @transform_4(%arg0: i32) -> (i32, i32) {
    %c0_i32 = arith.constant 0 : i32
    %c0_i32_0 = arith.constant 0 : i32
    %c0_i32_1 = arith.constant 0 : i32
    return %c0_i32, %c0_i32_0 : i32, i32
  }
  func.func @transform_5(%arg0: i32) -> (i32, i32) {
    %c0_i32 = arith.constant 0 : i32
    %c0_i32_0 = arith.constant 0 : i32
    %c0_i32_1 = arith.constant 0 : i32
    return %c0_i32, %c0_i32_0 : i32, i32
  }
  func.func @transform_6(%arg0: i32) -> (i32, i32) {
    %c0_i32 = arith.constant 0 : i32
    %c0_i32_0 = arith.constant 0 : i32
    return %arg0, %c0_i32 : i32, i32
  }
}

</mosaic_0001>

<llo_original>
// kernel: critic_forward.1
$region0: #{critic_forward.1}
  #allocation0 [shape = 'u32[]', space=smem, size = 0x4, offset = 0x4, fixed_abs, tag = 'smem constant byte address 0x4 - core index']
  #allocation1 [shape = 'u32[144,128]{1,0:T(1,128)}', space=vmem, size = 0x12000, scoped, tag = 'internal scratch']
  %s0 = inlined_call_operand.vmem [shape: bf16[8,16], index: 0, kind: input, shape index: {}]
  %s1 = inlined_call_operand.vmem [shape: bf16[8,6], index: 1, kind: input, shape index: {}]
  %s2 = inlined_call_operand.vmem [shape: bf16[16,128], index: 2, kind: input, shape index: {}]
  %s3 = inlined_call_operand.vmem [shape: bf16[6,128], index: 3, kind: input, shape index: {}]
  %s4 = inlined_call_operand.vmem [shape: f32[1,128], index: 4, kind: input, shape index: {}]
  %s5 = inlined_call_operand.vmem [shape: f32[1,128], index: 5, kind: input, shape index: {}]
  %s6 = inlined_call_operand.vmem [shape: f32[8,1], index: 6, kind: output, shape index: {}]
  %s7 = sld [smem:[#allocation0]]
  $region34: #{critic_forward.1} parent=0
    _
  %s9 = ssub.s32 1, %s7
  %s10 = scalar_select 0, %s9, %s7
  // Predicated region
  $region2: #{critic_forward.1} parent=0 // pred_check
    _
  $region3: #{critic_forward.1} parent=0 // pred_check_branch
    %12 = sbr.rel (0) target = $region5
  $region4: #{critic_forward.1} parent=0 // pred_region
    _
  $region5: #{critic_forward.1} parent=0 // pred_fallthru
    _
  // Predicated region
  $region6: #{critic_forward.1} parent=0 // pred_check
    _
  $region7: #{critic_forward.1} parent=0 // pred_check_branch
    %14 = sbr.rel (0) target = $region9
  $region8: #{critic_forward.1} parent=0 // pred_region
    _
  $region9: #{critic_forward.1} parent=0 // pred_fallthru
    _
  // Predicated region
  $region10: #{critic_forward.1} parent=0 // pred_check
    _
  $region11: #{critic_forward.1} parent=0 // pred_check_branch
    %16 = sbr.rel (0) target = $region13
  $region12: #{critic_forward.1} parent=0 // pred_region
    _
  $region13: #{critic_forward.1} parent=0 // pred_fallthru
    _
  // Predicated region
  $region14: #{critic_forward.1} parent=0 // pred_check
    _
  $region15: #{critic_forward.1} parent=0 // pred_check_branch
    %18 = sbr.rel (0) target = $region17
  $region16: #{critic_forward.1} parent=0 // pred_region
    _
  $region17: #{critic_forward.1} parent=0 // pred_fallthru
    _
  // Predicated region
  $region18: #{critic_forward.1} parent=0 // pred_check
    _
  $region19: #{critic_forward.1} parent=0 // pred_check_branch
    %20 = sbr.rel (0) target = $region21
  $region20: #{critic_forward.1} parent=0 // pred_region
    _
  $region21: #{critic_forward.1} parent=0 // pred_fallthru
    _
  // Predicated region
  $region22: #{critic_forward.1} parent=0 // pred_check
    _
  $region23: #{critic_forward.1} parent=0 // pred_check_branch
    %22 = sbr.rel (0) target = $region25
  $region24: #{critic_forward.1} parent=0 // pred_region
    _
  $region25: #{critic_forward.1} parent=0 // pred_fallthru
    _
  %v24 = vld [vmem:[%s0] sm:$0xf]
  %v25 = vld [vmem:[%s2] sm:$0xf]
  %v26 = vld [vmem:[%s2 + $0x4] sm:$0xf]
  %v27 = vld [vmem:[%s1] sm:$0xf]
  %v28 = vld [vmem:[%s3] sm:$0x7]
  %vm29 = vcmask 48128
  %v31 = vsel %vm29, %v27, 0
  %vm33 = vcmask 1042432
  %v35 = vsel %vm33, %v28, 0
  %37 = vmatprep.subr.bf16.mxu0 0
  %38 = vmatpush1.bf16.msra.mxu0 %v35
  %39 = vmatprep.subr.bf16.mxu0 0
  %40 = vmatpush1.bf16.msra.mxu0 0
  %41 = vmatprep.subr.bf16.mxu0 0
  %42 = vmatpush1.bf16.msra.mxu0 0
  %43 = vmatprep.subr.bf16.mxu0 0
  %44 = vmatpush1.bf16.msra.mxu0 0
  %45 = vmatprep.subr.bf16.mxu0 0
  %46 = vmatpush1.bf16.msra.mxu0 0
  %47 = vmatprep.subr.bf16.mxu0 0
  %48 = vmatpush1.bf16.msra.mxu0 0
  %49 = vmatprep.subr.bf16.mxu0 0
  %50 = vmatpush1.bf16.msra.mxu0 0
  %51 = vmatprep.subr.bf16.mxu0 0
  %52 = vmatpush1.bf16.msra.mxu0 0
  %53 = vmatprep.subr.bf16.mxu0 0
  %54 = vmatpush1.bf16.msra.mxu0 0
  %55 = vmatprep.subr.bf16.mxu0 0
  %56 = vmatpush1.bf16.msra.mxu0 0
  %57 = vmatprep.subr.bf16.mxu0 0
  %58 = vmatpush1.bf16.msra.mxu0 0
  %59 = vmatprep.subr.bf16.mxu0 0
  %60 = vmatpush1.bf16.msra.mxu0 0
  %61 = vmatprep.subr.bf16.mxu0 0
  %62 = vmatpush1.bf16.msra.mxu0 0
  %63 = vmatprep.subr.bf16.mxu0 0
  %64 = vmatpush1.bf16.msra.mxu0 0
  %65 = vmatprep.subr.bf16.mxu0 0
  %66 = vmatpush1.bf16.msra.mxu0 0
  %67 = vmatprep.subr.bf16.mxu0 0
  %68 = vmatpush1.bf16.msra.mxu0 0
  %69 = vmatprep.mubr.bf16.mxu0 0
  %70 = vmatmul.mubr.bf16.gmra.mrb[0].mxu0 %v31
  %v71 = vpop.f32.mrb[0].mxu0
  %v72 = vadd.f32 0.0, %v71
  %v73 = vpop.f32.mrb[0].mxu0
  %v74 = vpop.f32.mrb[0].mxu0
  %v75 = vpop.f32.mrb[0].mxu0
  %76 = vdwg.mxu0
  %v79 = vunpack.c.l.b16 %v25
  %v80 = vunpack.c.l.b16 %v26
  %v81 = vpack.c.b16 %v80, %v79
  %vm83 = vcmask 130048
  %v85 = vsel %vm83, %v24, 0
  %87 = vmatprep.subr.bf16.mxu0 0
  %88 = vmatpush1.bf16.msra.mxu0 %v81
  %89 = vmatprep.subr.bf16.mxu0 0
  %90 = vmatpush1.bf16.msra.mxu0 0
  %91 = vmatprep.subr.bf16.mxu0 0
  %92 = vmatpush1.bf16.msra.mxu0 0
  %93 = vmatprep.subr.bf16.mxu0 0
  %94 = vmatpush1.bf16.msra.mxu0 0
  %95 = vmatprep.subr.bf16.mxu0 0
  %96 = vmatpush1.bf16.msra.mxu0 0
  %97 = vmatprep.subr.bf16.mxu0 0
  %98 = vmatpush1.bf16.msra.mxu0 0
  %99 = vmatprep.subr.bf16.mxu0 0
  %100 = vmatpush1.bf16.msra.mxu0 0
  %101 = vmatprep.subr.bf16.mxu0 0
  %102 = vmatpush1.bf16.msra.mxu0 0
  %103 = vmatprep.subr.bf16.mxu0 0
  %104 = vmatpush1.bf16.msra.mxu0 0
  %105 = vmatprep.subr.bf16.mxu0 0
  %106 = vmatpush1.bf16.msra.mxu0 0
  %107 = vmatprep.subr.bf16.mxu0 0
  %108 = vmatpush1.bf16.msra.mxu0 0
  %109 = vmatprep.subr.bf16.mxu0 0
  %110 = vmatpush1.bf16.msra.mxu0 0
  %111 = vmatprep.subr.bf16.mxu0 0
  %112 = vmatpush1.bf16.msra.mxu0 0
  %113 = vmatprep.subr.bf16.mxu0 0
  %114 = vmatpush1.bf16.msra.mxu0 0
  %115 = vmatprep.subr.bf16.mxu0 0
  %116 = vmatpush1.bf16.msra.mxu0 0
  %117 = vmatprep.subr.bf16.mxu0 0
  %118 = vmatpush1.bf16.msra.mxu0 0
  %119 = vmatprep.mubr.bf16.mxu0 0
  %120 = vmatmul.mubr.bf16.gmra.mrb[0].mxu0 %v85
  %v121 = vpop.f32.mrb[0].mxu0
  %v122 = vadd.f32 %v72, %v121
  %v123 = vpop.f32.mrb[0].mxu0
  %v124 = vpop.f32.mrb[0].mxu0
  %v125 = vpop.f32.mrb[0].mxu0
  %126 = vdwg.mxu0
  %v127 = vld [vmem:[%s4] sm:$0x1]
  %v129 = vlaneseq
  %v130 = vshrl.u32 %v129, 7
  %v131 = vsub.s32 0, %v130
  %v132 = vrot.slane %v127, %v131
  %v134 = vadd.f32 %v122, %v132
  %v135 = vmax.f32 %v134, 0.0
  %v136 = vld [vmem:[%s5] sm:$0x1]
  %v138 = vlaneseq
  %v139 = vshrl.u32 %v138, 7
  %v140 = vsub.s32 0, %v139
  %v141 = vrot.slane %v136, %v140
  %v143 = vmul.f32 %v135, %v141
  %144 = vadd.xlane.f32.xlu0 %v143
  %v145 = vpop.xlane.xlu0 %144
  %vm146 = vcmask 7168
  %147 = vst.msk [vmem:[%s6] sm:$0xff] %vm146, %v145
  // Predicated region
  $region26: #{critic_forward.1} parent=0 // pred_check
    _
  $region27: #{critic_forward.1} parent=0 // pred_check_branch
    %149 = sbr.rel (0) target = $region29
  $region28: #{critic_forward.1} parent=0 // pred_region
    _
  $region29: #{critic_forward.1} parent=0 // pred_fallthru
    _
  // Predicated region
  $region30: #{critic_forward.1} parent=0 // pred_check
    _
  $region31: #{critic_forward.1} parent=0 // pred_check_branch
    %151 = sbr.rel (0) target = $region33
  $region32: #{critic_forward.1} parent=0 // pred_region
    _
  $region33: #{critic_forward.1} parent=0 // pred_fallthru
    _

</llo_original>
